<compile_context>
chip_gen: v7x
topology: tpu7x:2x2x1
jax: 0.10.0
libtpu: 0.0.40
codegen_flags: <defaults>
</compile_context>

<pallas_src>
import jax
import jax.numpy as jnp
import numpy as np
from jax import lax
from jax.experimental import pallas as pl
from jax.experimental.pallas import tpu as pltpu

# ---- module hyper-parameters (from the PyTorch script) ----
D_MODEL = 9
IMG_SIZE = (32, 32)
N_CHANNELS = 1          # the transpose-free layout below relies on n_channels == 1
PATCH_SIZE = (16, 16)

N_PATCHES_H = IMG_SIZE[0] // PATCH_SIZE[0]                 # 2
N_PATCHES_W = IMG_SIZE[1] // PATCH_SIZE[1]                 # 2
N_PATCH_TOKENS = N_PATCHES_H * N_PATCHES_W                 # 4
ROW_DIM = PATCH_SIZE[0] * IMG_SIZE[1]                      # 512  (one horizontal band)
OUT_DIM = N_PATCHES_W * D_MODEL                            # 18   (pw-major, d-minor)

MAX_TILE_B = 1024       # 4 MiB input block per step (8 MiB double-buffered)
SINGLE_TILE_MAX_B = 128 # deployment-size batches run as one grid step


# ---------------- the Pallas kernel ----------------
def patch_embed_kernel(x_ref, w_ref, b_ref, out_ref):
    # x_ref:   (rows, 512)  image bands for tile_b samples (rows = tile_b * 2)
    # w_ref:   (512, 18)    zero-expanded projection weight (VMEM-resident)
    # b_ref:   (1, 18)      bias, tiled over the two pw columns (f32)
    # out_ref: (rows, 18)   patch embeddings, (pw, d) packed in the lane dim
    out_ref[...] = (
        jnp.dot(x_ref[...], w_ref[...], preferred_element_type=jnp.float32)
        + b_ref[...]
    ).astype(out_ref.dtype)


# ---------------- wrapper-side layout glue ----------------
def _expand_weight(conv_w):
    """(9, 1, 16, 16) OIHW conv weight -> (512, 18) zero-expanded projection.

    W''[kh*32 + kw, pw*9 + d] = conv_w[d, 0, kh, kw - 16*pw] if kw is in pw's half else 0.
    Tiny (36 KiB); stays VMEM-resident inside the pallas_call.
    """
    w = conv_w.reshape(D_MODEL, PATCH_SIZE[0], PATCH_SIZE[1])   # (d, kh, kw)
    w = jnp.transpose(w, (1, 2, 0))                             # (kh, kw, d) = (16, 16, 9)
    z = jnp.zeros_like(w)
    left = jnp.concatenate([w, z], axis=-1)    # kw in [0,16)  -> pw=0 columns
    right = jnp.concatenate([z, w], axis=-1)   # kw in [16,32) -> pw=1 columns
    w2 = jnp.concatenate([left, right], axis=1)                 # (16, 32, 18)
    return w2.reshape(ROW_DIM, OUT_DIM)                         # (512, 18)


def _choose_tile_b(B):
    """Pick samples-per-grid-step (tile_b) and number of grid steps."""
    if B <= SINGLE_TILE_MAX_B:
        return B, 1                           # single step; block rows == full array dim
    # >= 2 (even) steps so the "parallel" axis feeds both v7x TensorCores; cap block
    # at MAX_TILE_B samples (4 MiB) to stay well inside v5e's 16 MiB scoped VMEM.
    n_target = max(2, pl.cdiv(B, MAX_TILE_B))
    if n_target % 2:
        n_target += 1
    tile_b = pl.cdiv(B, n_target)
    tile_b = ((tile_b + 3) // 4) * 4          # rows_per_tile = 2*tile_b multiple of 8
    return tile_b, pl.cdiv(B, tile_b)


def patch_embedding_pallas(x, conv_w, conv_b, *, use_bf16=False):
    """PatchEmbedding.forward.

    x:      (B, 1, 32, 32) float32, NCHW
    conv_w: (9, 1, 16, 16) float32, torch OIHW conv weight
    conv_b: (9,)           float32, conv bias
    returns (B, 4, 9) float32
    """
    B = x.shape[0]
    assert x.shape[1:] == (N_CHANNELS, IMG_SIZE[0], IMG_SIZE[1])
    assert N_CHANNELS == 1  # transpose-free band layout requires a single channel

    # Free (contiguous) reshape: row (b*2 + ph) is the ph-th 16-row band of image b.
    x2d = x.reshape(B * N_PATCHES_H, ROW_DIM)                       # (B*2, 512)
    w2 = _expand_weight(conv_w)                                     # (512, 18)
    b2 = jnp.tile(conv_b.reshape(1, D_MODEL), (1, N_PATCHES_W))     # (1, 18), f32
    b2 = b2.astype(jnp.float32)

    if use_bf16:
        # Halve input HBM traffic; MXU accumulates in f32, bias add in f32.
        x2d = x2d.astype(jnp.bfloat16)
        w2 = w2.astype(jnp.bfloat16)

    tile_b, n_tiles = _choose_tile_b(B)
    rows = tile_b * N_PATCHES_H

    out2d = pl.pallas_call(
        patch_embed_kernel,
        grid=(n_tiles,),
        in_specs=[
            pl.BlockSpec((rows, ROW_DIM), lambda i: (i, 0)),        # per-tile image bands
            pl.BlockSpec((ROW_DIM, OUT_DIM), lambda i: (0, 0)),     # resident weight
            pl.BlockSpec((1, OUT_DIM), lambda i: (0, 0)),           # resident bias
        ],
        # Ragged final block: out-of-bounds rows are masked on write by the pipeline,
        # so no wrapper-side padding / slicing is needed.
        out_specs=pl.BlockSpec((rows, OUT_DIM), lambda i: (i, 0)),
        out_shape=jax.ShapeDtypeStruct((B * N_PATCHES_H, OUT_DIM), jnp.float32),
        compiler_params=pltpu.CompilerParams(
            dimension_semantics=("parallel",),   # shard batch tiles across v7x's 2 TCs
        ),
    )(x2d, w2, b2)

    # (B*2, 18) row-major == (B, ph, pw, d) row-major == (B, 4, 9): free reshape.
    return out2d.reshape(B, N_PATCH_TOKENS, D_MODEL)


# ---------------- pure-JAX reference (real conv, mirrors the torch module) ----------------
def patch_embedding_ref(x, conv_w, conv_b):
    y = lax.conv_general_dilated(
        x, conv_w,
        window_strides=PATCH_SIZE, padding="VALID",
        dimension_numbers=("NCHW", "OIHW", "NCHW"),
        precision=lax.Precision.HIGHEST,
    )                                                         # (B, 9, 2, 2)
    y = y + conv_b.reshape(1, D_MODEL, 1, 1)
    B = x.shape[0]
    y = y.reshape(B, D_MODEL, N_PATCH_TOKENS)                 # flatten(2)
    return jnp.transpose(y, (0, 2, 1))                        # transpose(-2, -1)


if __name__ == "__main__":
    key = jax.random.PRNGKey(0)
    k_x, k_w, k_b = jax.random.split(key, 3)

    # Shapes dictated by the module: NCHW images (B, 1, 32, 32).
    B = 2
    x = jax.random.normal(k_x, (B, N_CHANNELS, *IMG_SIZE), jnp.float32)
    conv_w = 0.05 * jax.random.normal(k_w, (D_MODEL, N_CHANNELS, *PATCH_SIZE), jnp.float32)
    conv_b = 0.05 * jax.random.normal(k_b, (D_MODEL,), jnp.float32)

    out = jax.block_until_ready(patch_embedding_pallas(x, conv_w, conv_b))
    ref = jax.block_until_ready(patch_embedding_ref(x, conv_w, conv_b))
    assert out.shape == (B, N_PATCH_TOKENS, D_MODEL)
    assert bool(jnp.all(jnp.isfinite(out)))
    np.testing.assert_allclose(np.asarray(out), np.asarray(ref), atol=1e-4, rtol=1e-4)

    # Multi-tile path: grid=(2,), exact split (both v7x TensorCores busy).
    B2 = 600
    x2 = jax.random.normal(jax.random.PRNGKey(1), (B2, N_CHANNELS, *IMG_SIZE), jnp.float32)
    out2 = jax.block_until_ready(patch_embedding_pallas(x2, conv_w, conv_b))
    ref2 = jax.block_until_ready(patch_embedding_ref(x2, conv_w, conv_b))
    np.testing.assert_allclose(np.asarray(out2), np.asarray(ref2), atol=1e-4, rtol=1e-4)

    # Multi-tile path with a ragged final block (no jnp.pad; OOB output rows masked).
    B3 = 601
    x3 = jax.random.normal(jax.random.PRNGKey(2), (B3, N_CHANNELS, *IMG_SIZE), jnp.float32)
    out3 = jax.block_until_ready(patch_embedding_pallas(x3, conv_w, conv_b))
    ref3 = jax.block_until_ready(patch_embedding_ref(x3, conv_w, conv_b))
    np.testing.assert_allclose(np.asarray(out3), np.asarray(ref3), atol=1e-4, rtol=1e-4)

    # Optional bf16-input path (halves HBM traffic); accumulation stays f32.
    out_bf = jax.block_until_ready(patch_embedding_pallas(x2, conv_w, conv_b, use_bf16=True))
    np.testing.assert_allclose(np.asarray(out_bf), np.asarray(ref2), atol=3e-2, rtol=3e-2)

    print("KERNEL_OK")
</pallas_src>

<mosaic_0001>
module attributes {stable_mosaic.version = 11 : i64} {
  func.func @patch_embed_kernel(%arg0: i32, %arg1: memref<4x512xf32, #tpu.memory_space<vmem>>, %arg2: memref<512x18xf32, #tpu.memory_space<vmem>>, %arg3: memref<1x18xf32, #tpu.memory_space<vmem>>, %arg4: memref<4x18xf32, #tpu.memory_space<vmem>>) attributes {dimension_semantics = [#tpu.dimension_semantics<parallel>], iteration_bounds = array<i64: 1>, scalar_prefetch = 0 : i64, scratch_operands = 0 : i64, tpu.core_type = #tpu.core_type<tc>, window_params = [{transform_indices = @transform_0, window_bounds = array<i64: 4, 512>}, {pipeline_mode = #tpu.pipeline_mode<synchronous>, transform_indices = @transform_1, window_bounds = array<i64: 512, 18>}, {pipeline_mode = #tpu.pipeline_mode<synchronous>, transform_indices = @transform_2, window_bounds = array<i64: 1, 18>}, {transform_indices = @transform_3, window_bounds = array<i64: 4, 18>}]} {
    %c0 = arith.constant 0 : index
    %c0_0 = arith.constant 0 : index
    %0 = vector.load %arg1[%c0, %c0_0] : memref<4x512xf32, #tpu.memory_space<vmem>>, vector<4x512xf32>
    %c0_1 = arith.constant 0 : index
    %c0_2 = arith.constant 0 : index
    %1 = vector.load %arg2[%c0_1, %c0_2] : memref<512x18xf32, #tpu.memory_space<vmem>>, vector<512x18xf32>
    %cst = arith.constant dense<0.000000e+00> : vector<4x18xf32>
    %2 = tpu.matmul %0, %1, %cst {dimension_numbers = #tpu.dot_dimension_numbers<[1], [0], [0], [1], [0, 0, 1, 1], [], []>} : vector<4x512xf32>, vector<512x18xf32>, vector<4x18xf32> -> vector<4x18xf32>
    %c0_3 = arith.constant 0 : index
    %c0_4 = arith.constant 0 : index
    %3 = vector.load %arg3[%c0_3, %c0_4] : memref<1x18xf32, #tpu.memory_space<vmem>>, vector<1x18xf32>
    %4 = vector.broadcast %3 : vector<1x18xf32> to vector<4x18xf32>
    %5 = arith.addf %2, %4 : vector<4x18xf32>
    %c0_5 = arith.constant 0 : index
    %c0_6 = arith.constant 0 : index
    %6 = vector.load %arg4[%c0_5, %c0_6] : memref<4x18xf32, #tpu.memory_space<vmem>>, vector<4x18xf32>
    tpu.vector_store %arg4[%c0_5, %c0_6], %5 {strides = array<i32>} : memref<4x18xf32, #tpu.memory_space<vmem>>, vector<4x18xf32>,
    return
  }
  func.func @transform_0(%arg0: i32) -> (i32, i32) {
    %c0_i32 = arith.constant 0 : i32
    %c0_i32_0 = arith.constant 0 : i32
    return %arg0, %c0_i32 : i32, i32
  }
  func.func @transform_1(%arg0: i32) -> (i32, i32) {
    %c0_i32 = arith.constant 0 : i32
    %c0_i32_0 = arith.constant 0 : i32
    %c0_i32_1 = arith.constant 0 : i32
    return %c0_i32, %c0_i32_0 : i32, i32
  }
  func.func @transform_2(%arg0: i32) -> (i32, i32) {
    %c0_i32 = arith.constant 0 : i32
    %c0_i32_0 = arith.constant 0 : i32
    %c0_i32_1 = arith.constant 0 : i32
    return %c0_i32, %c0_i32_0 : i32, i32
  }
  func.func @transform_3(%arg0: i32) -> (i32, i32) {
    %c0_i32 = arith.constant 0 : i32
    %c0_i32_0 = arith.constant 0 : i32
    return %arg0, %c0_i32 : i32, i32
  }
}

</mosaic_0001>

<llo_original>
// kernel: tpu_custom_call.1
$region0: #{tpu_custom_call.1}
  #allocation0 [shape = 'u32[]', space=smem, size = 0x4, offset = 0x4, fixed_abs, tag = 'smem constant byte address 0x4 - core index']
  #allocation1 [shape = 'u32[144,128]{1,0:T(1,128)}', space=vmem, size = 0x12000, scoped, tag = 'internal scratch']
  %s0 = inlined_call_operand.vmem [shape: f32[4,512], index: 0, kind: input, shape index: {}]
  %s1 = inlined_call_operand.vmem [shape: f32[512,18], index: 1, kind: input, shape index: {}]
  %s2 = inlined_call_operand.vmem [shape: f32[1,18], index: 2, kind: input, shape index: {}]
  %s3 = inlined_call_operand.hbm [shape: f32[4,18], index: 3, kind: output, shape index: {}]
  %s4 = sld [smem:[#allocation0]]
  $region22: #{tpu_custom_call.1} parent=0
    _
  %s6 = ssub.s32 1, %s4
  %s7 = scalar_select 0, %s6, %s4
  $region1: #{tpu_custom_call.1} parent=0
    #allocation2 [shape = 'u8[2048]{0}', space=vmem, size = 0x800, scoped, tag = 'output window, operand 0, single buffered']
    #allocation3 [shape = 's32[1]{0}', space=sflag, size = 0x4, scoped, tag = 'scoped memory for tpu_custom_call.1']
    %8 = vsyncpa [#allocation3], 0
    // Predicated region
    $region2: #{tpu_custom_call.1} parent=1 // pred_check
      _
    $region3: #{tpu_custom_call.1} parent=1 // pred_check_branch
      %10 = sbr.rel (0) target = $region5
    $region4: #{tpu_custom_call.1} parent=1 // pred_region
      _
    $region5: #{tpu_custom_call.1} parent=1 // pred_fallthru
      _
    // Predicated region
    $region6: #{tpu_custom_call.1} parent=1 // pred_check
      _
    $region7: #{tpu_custom_call.1} parent=1 // pred_check_branch
      %12 = sbr.rel (0) target = $region9
    $region8: #{tpu_custom_call.1} parent=1 // pred_region
      _
    $region9: #{tpu_custom_call.1} parent=1 // pred_fallthru
      _
    // Predicated region
    $region10: #{tpu_custom_call.1} parent=1 // pred_check
      _
    $region11: #{tpu_custom_call.1} parent=1 // pred_check_branch
      %14 = sbr.rel (0) target = $region13
    $region12: #{tpu_custom_call.1} parent=1 // pred_region
      _
    $region13: #{tpu_custom_call.1} parent=1 // pred_fallthru
      _
    %v15 = vld [vmem:[%s0] sm:$0xff]
    %v16 = vld [vmem:[%s0 + $0x8] sm:$0xff]
    %v17 = vld [vmem:[%s1] sm:$0xff]
    %v18 = vld [vmem:[%s1 + $0x8] sm:$0xff]
    %v19 = vld [vmem:[%s1 + $0x10] sm:$0xff]
    %v20 = vld [vmem:[%s1 + $0x18] sm:$0xff]
    %v21 = vld [vmem:[%s1 + $0x20] sm:$0xff]
    %v22 = vld [vmem:[%s1 + $0x28] sm:$0xff]
    %v23 = vld [vmem:[%s1 + $0x30] sm:$0xff]
    %v24 = vld [vmem:[%s1 + $0x38] sm:$0xff]
    %v25 = vld [vmem:[%s1 + $0x40] sm:$0xff]
    %v26 = vld [vmem:[%s1 + $0x48] sm:$0xff]
    %v27 = vld [vmem:[%s1 + $0x50] sm:$0xff]
    %v28 = vld [vmem:[%s1 + $0x58] sm:$0xff]
    %v29 = vld [vmem:[%s1 + $0x60] sm:$0xff]
    %v30 = vld [vmem:[%s1 + $0x68] sm:$0xff]
    %v31 = vld [vmem:[%s1 + $0x70] sm:$0xff]
    %v32 = vld [vmem:[%s1 + $0x78] sm:$0xff]
    %v33 = vld [vmem:[%s1 + $0x80] sm:$0xff]
    %v34 = vld [vmem:[%s1 + $0x88] sm:$0xff]
    %v35 = vld [vmem:[%s1 + $0x90] sm:$0xff]
    %v36 = vld [vmem:[%s1 + $0x98] sm:$0xff]
    %v37 = vld [vmem:[%s1 + $0xa0] sm:$0xff]
    %v38 = vld [vmem:[%s1 + $0xa8] sm:$0xff]
    %v39 = vld [vmem:[%s1 + $0xb0] sm:$0xff]
    %v40 = vld [vmem:[%s1 + $0xb8] sm:$0xff]
    %v41 = vld [vmem:[%s1 + $0xc0] sm:$0xff]
    %v42 = vld [vmem:[%s1 + $0xc8] sm:$0xff]
    %v43 = vld [vmem:[%s1 + $0xd0] sm:$0xff]
    %v44 = vld [vmem:[%s1 + $0xd8] sm:$0xff]
    %v45 = vld [vmem:[%s1 + $0xe0] sm:$0xff]
    %v46 = vld [vmem:[%s1 + $0xe8] sm:$0xff]
    %v47 = vld [vmem:[%s1 + $0xf0] sm:$0xff]
    %v48 = vld [vmem:[%s1 + $0xf8] sm:$0xff]
    %v49 = vld [vmem:[%s1 + $0x100] sm:$0xff]
    %v50 = vld [vmem:[%s1 + $0x108] sm:$0xff]
    %v51 = vld [vmem:[%s1 + $0x110] sm:$0xff]
    %v52 = vld [vmem:[%s1 + $0x118] sm:$0xff]
    %v53 = vld [vmem:[%s1 + $0x120] sm:$0xff]
    %v54 = vld [vmem:[%s1 + $0x128] sm:$0xff]
    %v55 = vld [vmem:[%s1 + $0x130] sm:$0xff]
    %v56 = vld [vmem:[%s1 + $0x138] sm:$0xff]
    %v57 = vld [vmem:[%s1 + $0x140] sm:$0xff]
    %v58 = vld [vmem:[%s1 + $0x148] sm:$0xff]
    %v59 = vld [vmem:[%s1 + $0x150] sm:$0xff]
    %v60 = vld [vmem:[%s1 + $0x158] sm:$0xff]
    %v61 = vld [vmem:[%s1 + $0x160] sm:$0xff]
    %v62 = vld [vmem:[%s1 + $0x168] sm:$0xff]
    %v63 = vld [vmem:[%s1 + $0x170] sm:$0xff]
    %v64 = vld [vmem:[%s1 + $0x178] sm:$0xff]
    %v65 = vld [vmem:[%s1 + $0x180] sm:$0xff]
    %v66 = vld [vmem:[%s1 + $0x188] sm:$0xff]
    %v67 = vld [vmem:[%s1 + $0x190] sm:$0xff]
    %v68 = vld [vmem:[%s1 + $0x198] sm:$0xff]
    %v69 = vld [vmem:[%s1 + $0x1a0] sm:$0xff]
    %v70 = vld [vmem:[%s1 + $0x1a8] sm:$0xff]
    %v71 = vld [vmem:[%s1 + $0x1b0] sm:$0xff]
    %v72 = vld [vmem:[%s1 + $0x1b8] sm:$0xff]
    %v73 = vld [vmem:[%s1 + $0x1c0] sm:$0xff]
    %v74 = vld [vmem:[%s1 + $0x1c8] sm:$0xff]
    %v75 = vld [vmem:[%s1 + $0x1d0] sm:$0xff]
    %v76 = vld [vmem:[%s1 + $0x1d8] sm:$0xff]
    %v77 = vld [vmem:[%s1 + $0x1e0] sm:$0xff]
    %v78 = vld [vmem:[%s1 + $0x1e8] sm:$0xff]
    %v79 = vld [vmem:[%s1 + $0x1f0] sm:$0xff]
    %v80 = vld [vmem:[%s1 + $0x1f8] sm:$0xff]
    %v81 = vld [vmem:[%s2] sm:$0x1]
    %v83 = vlaneseq
    %v84 = vshrl.u32 %v83, 7
    %v85 = vsub.s32 0, %v84
    %v86 = vrot.slane %v81, %v85
    %v90 = vcombine.high %v15, %v15
    %v91 = vcombine.high %v16, %v16
    %94 = vmatprep.subr.mxu0 0.0
    %95 = vmatpush1.msra.mxu0 %v17
    %96 = vmatprep.subr.mxu0 0.0
    %97 = vmatpush1.msra.mxu0 %v18
    %98 = vmatprep.subr.mxu0 0.0
    %99 = vmatpush1.msra.mxu0 %v19
    %100 = vmatprep.subr.mxu0 0.0
    %101 = vmatpush1.msra.mxu0 %v20
    %102 = vmatprep.subr.mxu0 0.0
    %103 = vmatpush1.msra.mxu0 %v21
    %104 = vmatprep.subr.mxu0 0.0
    %105 = vmatpush1.msra.mxu0 %v22
    %106 = vmatprep.subr.mxu0 0.0
    %107 = vmatpush1.msra.mxu0 %v23
    %108 = vmatprep.subr.mxu0 0.0
    %109 = vmatpush1.msra.mxu0 %v24
    %110 = vmatprep.subr.mxu0 0.0
    %111 = vmatpush1.msra.mxu0 %v25
    %112 = vmatprep.subr.mxu0 0.0
    %113 = vmatpush1.msra.mxu0 %v26
    %114 = vmatprep.subr.mxu0 0.0
    %115 = vmatpush1.msra.mxu0 %v27
    %116 = vmatprep.subr.mxu0 0.0
    %117 = vmatpush1.msra.mxu0 %v28
    %118 = vmatprep.subr.mxu0 0.0
    %119 = vmatpush1.msra.mxu0 %v29
    %120 = vmatprep.subr.mxu0 0.0
    %121 = vmatpush1.msra.mxu0 %v30
    %122 = vmatprep.subr.mxu0 0.0
    %123 = vmatpush1.msra.mxu0 %v31
    %124 = vmatprep.subr.mxu0 0.0
    %125 = vmatpush1.msra.mxu0 %v32
    %126 = vmatprep.subr.mxu0 0.0
    %127 = vmatpush1.msra.mxu0 %v33
    %128 = vmatprep.subr.mxu0 0.0
    %129 = vmatpush1.msra.mxu0 %v34
    %130 = vmatprep.subr.mxu0 0.0
    %131 = vmatpush1.msra.mxu0 %v35
    %132 = vmatprep.subr.mxu0 0.0
    %133 = vmatpush1.msra.mxu0 %v36
    %134 = vmatprep.subr.mxu0 0.0
    %135 = vmatpush1.msra.mxu0 %v37
    %136 = vmatprep.subr.mxu0 0.0
    %137 = vmatpush1.msra.mxu0 %v38
    %138 = vmatprep.subr.mxu0 0.0
    %139 = vmatpush1.msra.mxu0 %v39
    %140 = vmatprep.subr.mxu0 0.0
    %141 = vmatpush1.msra.mxu0 %v40
    %142 = vmatprep.subr.mxu0 0.0
    %143 = vmatpush1.msra.mxu0 %v41
    %144 = vmatprep.subr.mxu0 0.0
    %145 = vmatpush1.msra.mxu0 %v42
    %146 = vmatprep.subr.mxu0 0.0
    %147 = vmatpush1.msra.mxu0 %v43
    %148 = vmatprep.subr.mxu0 0.0
    %149 = vmatpush1.msra.mxu0 %v44
    %150 = vmatprep.subr.mxu0 0.0
    %151 = vmatpush1.msra.mxu0 %v45
    %152 = vmatprep.subr.mxu0 0.0
    %153 = vmatpush1.msra.mxu0 %v46
    %154 = vmatprep.subr.mxu0 0.0
    %155 = vmatpush1.msra.mxu0 %v47
    %156 = vmatprep.subr.mxu0 0.0
    %157 = vmatpush1.msra.mxu0 %v48
    %158 = vmatprep.mubr.f32.mxu0 %v90
    %159 = vmatmul.mubr.f32.gmra.mrb[0].mxu0 %v15
    %v160 = vpop.f32.mrb[0].mxu0
    %v161 = vadd.f32 %v86, %v160
    %v162 = vpop.f32.mrb[0].mxu0
    %163 = vdwg.mxu0
    %164 = vmatprep.subr.mxu0 0.0
    %165 = vmatpush1.msra.mxu0 %v49
    %166 = vmatprep.subr.mxu0 0.0
    %167 = vmatpush1.msra.mxu0 %v50
    %168 = vmatprep.subr.mxu0 0.0
    %169 = vmatpush1.msra.mxu0 %v51
    %170 = vmatprep.subr.mxu0 0.0
    %171 = vmatpush1.msra.mxu0 %v52
    %172 = vmatprep.subr.mxu0 0.0
    %173 = vmatpush1.msra.mxu0 %v53
    %174 = vmatprep.subr.mxu0 0.0
    %175 = vmatpush1.msra.mxu0 %v54
    %176 = vmatprep.subr.mxu0 0.0
    %177 = vmatpush1.msra.mxu0 %v55
    %178 = vmatprep.subr.mxu0 0.0
    %179 = vmatpush1.msra.mxu0 %v56
    %180 = vmatprep.subr.mxu0 0.0
    %181 = vmatpush1.msra.mxu0 %v57
    %182 = vmatprep.subr.mxu0 0.0
    %183 = vmatpush1.msra.mxu0 %v58
    %184 = vmatprep.subr.mxu0 0.0
    %185 = vmatpush1.msra.mxu0 %v59
    %186 = vmatprep.subr.mxu0 0.0
    %187 = vmatpush1.msra.mxu0 %v60
    %188 = vmatprep.subr.mxu0 0.0
    %189 = vmatpush1.msra.mxu0 %v61
    %190 = vmatprep.subr.mxu0 0.0
    %191 = vmatpush1.msra.mxu0 %v62
    %192 = vmatprep.subr.mxu0 0.0
    %193 = vmatpush1.msra.mxu0 %v63
    %194 = vmatprep.subr.mxu0 0.0
    %195 = vmatpush1.msra.mxu0 %v64
    %196 = vmatprep.subr.mxu0 0.0
    %197 = vmatpush1.msra.mxu0 %v65
    %198 = vmatprep.subr.mxu0 0.0
    %199 = vmatpush1.msra.mxu0 %v66
    %200 = vmatprep.subr.mxu0 0.0
    %201 = vmatpush1.msra.mxu0 %v67
    %202 = vmatprep.subr.mxu0 0.0
    %203 = vmatpush1.msra.mxu0 %v68
    %204 = vmatprep.subr.mxu0 0.0
    %205 = vmatpush1.msra.mxu0 %v69
    %206 = vmatprep.subr.mxu0 0.0
    %207 = vmatpush1.msra.mxu0 %v70
    %208 = vmatprep.subr.mxu0 0.0
    %209 = vmatpush1.msra.mxu0 %v71
    %210 = vmatprep.subr.mxu0 0.0
    %211 = vmatpush1.msra.mxu0 %v72
    %212 = vmatprep.subr.mxu0 0.0
    %213 = vmatpush1.msra.mxu0 %v73
    %214 = vmatprep.subr.mxu0 0.0
    %215 = vmatpush1.msra.mxu0 %v74
    %216 = vmatprep.subr.mxu0 0.0
    %217 = vmatpush1.msra.mxu0 %v75
    %218 = vmatprep.subr.mxu0 0.0
    %219 = vmatpush1.msra.mxu0 %v76
    %220 = vmatprep.subr.mxu0 0.0
    %221 = vmatpush1.msra.mxu0 %v77
    %222 = vmatprep.subr.mxu0 0.0
    %223 = vmatpush1.msra.mxu0 %v78
    %224 = vmatprep.subr.mxu0 0.0
    %225 = vmatpush1.msra.mxu0 %v79
    %226 = vmatprep.subr.mxu0 0.0
    %227 = vmatpush1.msra.mxu0 %v80
    %228 = vmatprep.mubr.f32.mxu0 %v91
    %229 = vmatmul.mubr.f32.gmra.mrb[0].mxu0 %v16
    %v230 = vpop.f32.mrb[0].mxu0
    %v231 = vadd.f32 %v161, %v230
    %v232 = vpop.f32.mrb[0].mxu0
    %233 = vdwg.mxu0
    %vm234 = vcmask 142336
    %235 = vst.msk [vmem:[#allocation2] sm:$0xf] %vm234, %v231
    // Predicated region
    $region14: #{tpu_custom_call.1} parent=1 // pred_check
      _
    $region15: #{tpu_custom_call.1} parent=1 // pred_check_branch
      %237 = sbr.rel (0) target = $region17
    $region16: #{tpu_custom_call.1} parent=1 // pred_region
      %s239 = ssub.s32 64, 64
      %240 = vsyncadd [#allocation3], %s239
      %s242 = sshll.u32 [#allocation2], 4
      %s243 = int_to_ptr.vmem [resolvable:$true] %s242
      %245 = dma.vmem_to_hbm [thread:$0]  %s243, 64, %s3, [#allocation3]
    $region17: #{tpu_custom_call.1} parent=1 // pred_fallthru
      _
    // Predicated region
    $region18: #{tpu_custom_call.1} parent=1 // pred_check
      _
    $region19: #{tpu_custom_call.1} parent=1 // pred_check_branch
      %247 = sbr.rel (0) target = $region21
    $region20: #{tpu_custom_call.1} parent=1 // pred_region
      %248 = dma.done [#allocation3], 64
    $region21: #{tpu_custom_call.1} parent=1 // pred_fallthru
      _
    %249 = vsyncpa [#allocation3], 1

</llo_original>
